<compile_context>
chip_gen: v7x
topology: tpu7x:2x2x1
jax: 0.10.0
libtpu: 0.0.40
codegen_flags: <defaults>
</compile_context>

<pallas_src>
import jax
import jax.numpy as jnp
from jax.experimental import pallas as pl
from jax.experimental.pallas import tpu as pltpu

ALPHA = 2.0 / 5.0
BETA = 4.0 / 5.0


def _round_up(n, m):
    return ((n + m - 1) // m) * m


# ------------------------------------------------------------------ kernel ---
def gru_flow_kernel(
    x_ref, h_ref, t_ref,
    wrz_ref, wtrz_ref, brz_ref,      # fused r|z gate: (Dp, 2Dp), (1, 2Dp), (1, 2Dp)
    whh_ref, wth_ref, bh_ref,        # u gate:         (Dp, Dp),  (1, Dp),  (1, Dp)
    timew_ref,                       # TimeTanh weight (1, Dp)
    o_ref,
):
    x = x_ref[...].astype(jnp.float32)       # (TM, Dp) f32
    h = h_ref[...]                           # (TM, Dp) matmul dtype (bf16 default)
    t = t_ref[...]                           # (TM, 1)  f32
    Dp = x.shape[-1]

    mm_dtype = wrz_ref.dtype                 # bf16 (default) or f32

    # Fused r/z pre-activation: one wide MXU push + one EUP pass over (TM, 2*Dp).
    rz_pre = (
        jnp.dot(h.astype(mm_dtype), wrz_ref[...], preferred_element_type=jnp.float32)
        + t * wtrz_ref[...]
        + brz_ref[...]
    )
    rz = jax.nn.sigmoid(rz_pre)
    r = BETA * rz[:, :Dp]
    z = ALPHA * rz[:, Dp:]

    # u = tanh(lin_hh2([r*h, t]))  (separate matmul: it consumes r*h)
    rh = (r * h.astype(jnp.float32)).astype(mm_dtype)
    u = jnp.tanh(
        jnp.dot(rh, whh_ref[...], preferred_element_type=jnp.float32)
        + t * wth_ref[...]
        + bh_ref[...]
    )

    phi = jnp.tanh(t * timew_ref[...])                  # time_net(t) = TimeTanh
    o_ref[...] = (x + phi * (z * (u - x))).astype(o_ref.dtype)


# ----------------------------------------------------------------- wrapper ---
def gru_flow_block_forward(x, h, t, params, *, matmul_dtype=jnp.bfloat16,
                           out_dtype=jnp.float32, tm_max=512):
    """x, h: (B, S, D); t: (B, S, 1). Returns (B, S, D) in out_dtype (default f32).

    matmul_dtype: MXU operand dtype (bf16 default on all TPU generations;
    jnp.float32 for bit-tight agreement with the f32 reference).
    """
    B, S, D = x.shape
    M = B * S
    Dp = _round_up(D, 128)                   # lane-dense feature dim
    Mp8 = _round_up(max(M, 1), 8)

    f32 = jnp.float32
    w_isz = jnp.dtype(matmul_dtype).itemsize
    o_isz = jnp.dtype(out_dtype).itemsize

    # --- VMEM accounting ------------------------------------------------------
    # Weights single-buffered (pl.Buffered(1)); x/h/out double-buffered row blocks;
    # ~8*Dp f32 per row of live intermediates (rz_pre, rz, r, z, rh, u, phi, ...).
    weight_bytes = (Dp * 2 * Dp + Dp * Dp) * w_isz + 6 * Dp * 4
    per_row_bytes = 2 * ((4 + w_isz + o_isz) * Dp + 4) + 8 * Dp * 4
    act_budget = max((36 << 20) - weight_bytes, 1 << 20)
    vmem_cap_rows = max(8, (act_budget // per_row_bytes) // 8 * 8)
    tm_cap = max(8, min(tm_max, vmem_cap_rows) // 8 * 8)

    # --- row tile: (almost) even split, >= ~4 grid steps so v7x megacore can shard,
    #     minimal zero-row padding.  (Multiples of 256 would marginally help the
    #     v6e/v7x 256x256 MXU; even-split + minimal padding dominates in practice.)
    n_min = max(-(-Mp8 // tm_cap), min(4, Mp8 // 8))
    best = None
    for n in range(n_min, n_min + 8):
        tm = _round_up(-(-Mp8 // n), 8)
        pad = n * tm - Mp8
        if best is None or (pad, n) < (best[1], best[2]):
            best = (tm, pad, n)
    TM, _, n_tiles = best
    Mp = n_tiles * TM

    needed = weight_bytes + TM * per_row_bytes + (6 << 20)
    vmem_limit = int(min(max(needed, 32 << 20), 100 << 20))

    # --- activations: fast path when already (8,128)-aligned (no pad copies) ----
    aligned = (D == Dp) and (M == Mp)
    if aligned:
        x2 = x.reshape(M, D).astype(f32)
        h2 = h.reshape(M, D).astype(matmul_dtype)
        t2 = t.reshape(M, 1).astype(f32)
    else:
        # Zero padding is inert for this math; padded rows/lanes are sliced off.
        x2 = jnp.zeros((Mp, Dp), f32).at[:M, :D].set(x.reshape(M, D).astype(f32))
        h2 = jnp.zeros((Mp, Dp), matmul_dtype).at[:M, :D].set(
            h.reshape(M, D).astype(matmul_dtype))
        t2 = jnp.zeros((Mp, 1), f32).at[:M, :].set(t.reshape(M, 1).astype(f32))

    # --- fuse + pad parameters (r gate in columns [0, Dp), z gate in [Dp, 2Dp)) ---
    (whr, wtr, br, whz, wtz, bz, whh, wth, bh, time_w) = params
    wrz = (
        jnp.zeros((Dp, 2 * Dp), f32)
        .at[:D, :D].set(whr)
        .at[:D, Dp:Dp + D].set(whz)
    ).astype(matmul_dtype)
    wtrz = jnp.zeros((1, 2 * Dp), f32).at[:, :D].set(wtr).at[:, Dp:Dp + D].set(wtz)
    brz = jnp.zeros((1, 2 * Dp), f32).at[:, :D].set(br).at[:, Dp:Dp + D].set(bz)

    whh_p = jnp.zeros((Dp, Dp), f32).at[:D, :D].set(whh).astype(matmul_dtype)
    wth_p = jnp.zeros((1, Dp), f32).at[:, :D].set(wth)
    bh_p = jnp.zeros((1, Dp), f32).at[:, :D].set(bh)
    timew_p = jnp.zeros((1, Dp), f32).at[:, :D].set(time_w)

    # Row-tiled activation blocks vs. resident (single-buffered) weight blocks.
    row_spec = lambda shape: pl.BlockSpec(shape, lambda i: (i, 0))
    const_spec = lambda shape: pl.BlockSpec(shape, lambda i: (0, 0),
                                            pipeline_mode=pl.Buffered(1))

    out = pl.pallas_call(
        gru_flow_kernel,
        out_shape=jax.ShapeDtypeStruct((Mp, Dp), out_dtype),
        grid=(n_tiles,),
        in_specs=[
            row_spec((TM, Dp)),          # x   (f32)
            row_spec((TM, Dp)),          # h   (matmul dtype)
            row_spec((TM, 1)),           # t   (f32)
            const_spec((Dp, 2 * Dp)),    # W_rz
            const_spec((1, 2 * Dp)),     # Wt_rz
            const_spec((1, 2 * Dp)),     # b_rz
            const_spec((Dp, Dp)),        # W_hh
            const_spec((1, Dp)),         # Wt_h
            const_spec((1, Dp)),         # b_h
            const_spec((1, Dp)),         # time_w
        ],
        out_specs=row_spec((TM, Dp)),
        compiler_params=pltpu.CompilerParams(
            dimension_semantics=("parallel",),   # rows independent -> megacore on v7x
            vmem_limit_bytes=vmem_limit,
        ),
    )(x2, h2, t2, wrz, wtrz, brz, whh_p, wth_p, bh_p, timew_p)

    if aligned:
        return out.reshape(B, S, D)
    return out[:M, :D].reshape(B, S, D)


# ----------------------------------------------------- parameter setup glue ---
def _spectral_normalize(w, key, n_iters=5):
    """Mimic torch.nn.utils.spectral_norm with n_power_iterations=5.
    w: (out_features, in_features)."""
    u = jax.random.normal(key, (w.shape[0],), dtype=jnp.float32)
    u = u / (jnp.linalg.norm(u) + 1e-12)
    v = None
    for _ in range(n_iters):
        v = w.T @ u
        v = v / (jnp.linalg.norm(v) + 1e-12)
        u = w @ v
        u = u / (jnp.linalg.norm(u) + 1e-12)
    sigma = u @ (w @ v)
    return w / sigma


def make_params(key, hidden_dim):
    D = hidden_dim
    keys = jax.random.split(key, 8)

    def make_linear(kw, kb, ksn):
        # nn.Linear(D+1, D): weight (D, D+1), bias (D,)
        bound = 1.0 / jnp.sqrt(D + 1.0)
        w = jax.random.uniform(kw, (D, D + 1), jnp.float32, -bound, bound)
        b = jax.random.uniform(kb, (D,), jnp.float32, -bound, bound)
        w = _spectral_normalize(w, ksn, n_iters=5)
        wt = w.T                       # (D+1, D): kernel-friendly (in, out) layout
        return wt[:D, :], wt[D:, :], b.reshape(1, D)   # (D,D), (1,D), (1,D)

    whh, wth, bh = make_linear(keys[0], keys[1], keys[6])
    whz, wtz, bz = make_linear(keys[2], keys[3], keys[6])
    whr, wtr, br = make_linear(keys[4], keys[5], keys[6])
    time_w = jax.random.normal(keys[7], (1, D), jnp.float32)  # TimeTanh weight
    return (whr, wtr, br, whz, wtz, bz, whh, wth, bh, time_w)


# -------------------------------------------------------- pure-JAX reference --
def reference_forward(x, h, t, params):
    (whr, wtr, br, whz, wtz, bz, whh, wth, bh, time_w) = params
    r = BETA * jax.nn.sigmoid(h @ whr + t * wtr + br)
    z = ALPHA * jax.nn.sigmoid(h @ whz + t * wtz + bz)
    u = jnp.tanh((r * h) @ whh + t * wth + bh)
    res = z * (u - x)
    return x + jnp.tanh(t * time_w) * res


# --------------------------------------------------------------------- main ---
if __name__ == "__main__":
    # TODO(synk): the forward(h=None) branch of the PyTorch module calls lin_hr/hz/hh,
    # which are never defined in __init__ (it would raise); only the residual2 path
    # (h is not None) is implemented here.
    B, S, D = 2, 8, 32
    key = jax.random.PRNGKey(0)
    kx, kh, kt, kp = jax.random.split(key, 4)

    x = jax.random.normal(kx, (B, S, D), jnp.float32)
    h = jax.random.normal(kh, (B, S, D), jnp.float32)
    t = jax.random.uniform(kt, (B, S, 1), jnp.float32)

    params = make_params(kp, D)
    ref = reference_forward(x, h, t, params)

    # f32 MXU path: bit-tight agreement with the f32 reference.
    out_f32 = jax.block_until_ready(
        gru_flow_block_forward(x, h, t, params, matmul_dtype=jnp.float32))
    assert out_f32.shape == (B, S, D)
    assert jnp.allclose(out_f32, ref, atol=1e-5, rtol=1e-5), "f32 path mismatch"

    # bf16 MXU path (default, fast on every TPU generation): looser tolerance vs f32 ref.
    out_bf16 = jax.block_until_ready(gru_flow_block_forward(x, h, t, params))
    assert out_bf16.shape == (B, S, D)
    assert jnp.allclose(out_bf16, ref, atol=5e-2, rtol=5e-2), "bf16 path mismatch"

    print("KERNEL_OK")
</pallas_src>

<mosaic_0001>
module attributes {stable_mosaic.version = 11 : i64} {
  func.func @gru_flow_kernel(%arg0: i32, %arg1: memref<8x128xf32, #tpu.memory_space<vmem>>, %arg2: memref<8x128xf32, #tpu.memory_space<vmem>>, %arg3: memref<8x1xf32, #tpu.memory_space<vmem>>, %arg4: memref<128x256xf32, #tpu.memory_space<vmem>>, %arg5: memref<1x256xf32, #tpu.memory_space<vmem>>, %arg6: memref<1x256xf32, #tpu.memory_space<vmem>>, %arg7: memref<128x128xf32, #tpu.memory_space<vmem>>, %arg8: memref<1x128xf32, #tpu.memory_space<vmem>>, %arg9: memref<1x128xf32, #tpu.memory_space<vmem>>, %arg10: memref<1x128xf32, #tpu.memory_space<vmem>>, %arg11: memref<8x128xf32, #tpu.memory_space<vmem>>) attributes {dimension_semantics = [#tpu.dimension_semantics<parallel>], iteration_bounds = array<i64: 2>, scalar_prefetch = 0 : i64, scratch_operands = 0 : i64, tpu.core_type = #tpu.core_type<tc>, window_params = [{transform_indices = @transform_0, window_bounds = array<i64: 8, 128>}, {transform_indices = @transform_1, window_bounds = array<i64: 8, 128>}, {transform_indices = @transform_2, window_bounds = array<i64: 8, 1>}, {pipeline_mode = #tpu.pipeline_mode<synchronous>, transform_indices = @transform_3, window_bounds = array<i64: 128, 256>}, {pipeline_mode = #tpu.pipeline_mode<synchronous>, transform_indices = @transform_4, window_bounds = array<i64: 1, 256>}, {pipeline_mode = #tpu.pipeline_mode<synchronous>, transform_indices = @transform_5, window_bounds = array<i64: 1, 256>}, {pipeline_mode = #tpu.pipeline_mode<synchronous>, transform_indices = @transform_6, window_bounds = array<i64: 128, 128>}, {pipeline_mode = #tpu.pipeline_mode<synchronous>, transform_indices = @transform_7, window_bounds = array<i64: 1, 128>}, {pipeline_mode = #tpu.pipeline_mode<synchronous>, transform_indices = @transform_8, window_bounds = array<i64: 1, 128>}, {pipeline_mode = #tpu.pipeline_mode<synchronous>, transform_indices = @transform_9, window_bounds = array<i64: 1, 128>}, {transform_indices = @transform_10, window_bounds = array<i64: 8, 128>}]} {
    %c0 = arith.constant 0 : index
    %c0_0 = arith.constant 0 : index
    %0 = vector.load %arg1[%c0, %c0_0] : memref<8x128xf32, #tpu.memory_space<vmem>>, vector<8x128xf32>
    %c0_1 = arith.constant 0 : index
    %c0_2 = arith.constant 0 : index
    %1 = vector.load %arg2[%c0_1, %c0_2] : memref<8x128xf32, #tpu.memory_space<vmem>>, vector<8x128xf32>
    %c0_3 = arith.constant 0 : index
    %c0_4 = arith.constant 0 : index
    %2 = vector.load %arg3[%c0_3, %c0_4] : memref<8x1xf32, #tpu.memory_space<vmem>>, vector<8x1xf32>
    %c0_5 = arith.constant 0 : index
    %c0_6 = arith.constant 0 : index
    %3 = vector.load %arg4[%c0_5, %c0_6] : memref<128x256xf32, #tpu.memory_space<vmem>>, vector<128x256xf32>
    %cst = arith.constant dense<0.000000e+00> : vector<8x256xf32>
    %4 = tpu.matmul %1, %3, %cst {dimension_numbers = #tpu.dot_dimension_numbers<[1], [0], [0], [1], [0, 0, 1, 1], [], []>} : vector<8x128xf32>, vector<128x256xf32>, vector<8x256xf32> -> vector<8x256xf32>
    %c0_7 = arith.constant 0 : index
    %c0_8 = arith.constant 0 : index
    %5 = vector.load %arg5[%c0_7, %c0_8] : memref<1x256xf32, #tpu.memory_space<vmem>>, vector<1x256xf32>
    %6 = vector.broadcast %2 : vector<8x1xf32> to vector<8x256xf32>
    %7 = vector.broadcast %5 : vector<1x256xf32> to vector<8x256xf32>
    %8 = arith.mulf %6, %7 : vector<8x256xf32>
    %9 = arith.addf %4, %8 : vector<8x256xf32>
    %c0_9 = arith.constant 0 : index
    %c0_10 = arith.constant 0 : index
    %10 = vector.load %arg6[%c0_9, %c0_10] : memref<1x256xf32, #tpu.memory_space<vmem>>, vector<1x256xf32>
    %11 = vector.broadcast %10 : vector<1x256xf32> to vector<8x256xf32>
    %12 = arith.addf %9, %11 : vector<8x256xf32>
    %13 = arith.negf %12 : vector<8x256xf32>
    %14 = math.exp %13 : vector<8x256xf32>
    %cst_11 = arith.constant 1.000000e+00 : f32
    %15 = vector.broadcast %cst_11 : f32 to vector<8x256xf32>
    %16 = arith.addf %15, %14 : vector<8x256xf32>
    %17 = arith.divf %15, %16 : vector<8x256xf32>
    %18 = vector.extract_strided_slice %17 {offsets = [0, 0], sizes = [8, 128], strides = [1, 1]} : vector<8x256xf32> to vector<8x128xf32>
    %cst_12 = arith.constant 8.000000e-01 : f32
    %19 = vector.broadcast %cst_12 : f32 to vector<8x128xf32>
    %20 = arith.mulf %19, %18 : vector<8x128xf32>
    %21 = vector.extract_strided_slice %17 {offsets = [0, 128], sizes = [8, 128], strides = [1, 1]} : vector<8x256xf32> to vector<8x128xf32>
    %cst_13 = arith.constant 4.000000e-01 : f32
    %22 = vector.broadcast %cst_13 : f32 to vector<8x128xf32>
    %23 = arith.mulf %22, %21 : vector<8x128xf32>
    %24 = arith.mulf %20, %1 : vector<8x128xf32>
    %c0_14 = arith.constant 0 : index
    %c0_15 = arith.constant 0 : index
    %25 = vector.load %arg7[%c0_14, %c0_15] : memref<128x128xf32, #tpu.memory_space<vmem>>, vector<128x128xf32>
    %cst_16 = arith.constant dense<0.000000e+00> : vector<8x128xf32>
    %26 = tpu.matmul %24, %25, %cst_16 {dimension_numbers = #tpu.dot_dimension_numbers<[1], [0], [0], [1], [0, 0, 1, 1], [], []>} : vector<8x128xf32>, vector<128x128xf32>, vector<8x128xf32> -> vector<8x128xf32>
    %c0_17 = arith.constant 0 : index
    %c0_18 = arith.constant 0 : index
    %27 = vector.load %arg8[%c0_17, %c0_18] : memref<1x128xf32, #tpu.memory_space<vmem>>, vector<1x128xf32>
    %28 = vector.broadcast %2 : vector<8x1xf32> to vector<8x128xf32>
    %29 = vector.broadcast %27 : vector<1x128xf32> to vector<8x128xf32>
    %30 = arith.mulf %28, %29 : vector<8x128xf32>
    %31 = arith.addf %26, %30 : vector<8x128xf32>
    %c0_19 = arith.constant 0 : index
    %c0_20 = arith.constant 0 : index
    %32 = vector.load %arg9[%c0_19, %c0_20] : memref<1x128xf32, #tpu.memory_space<vmem>>, vector<1x128xf32>
    %33 = vector.broadcast %32 : vector<1x128xf32> to vector<8x128xf32>
    %34 = arith.addf %31, %33 : vector<8x128xf32>
    %35 = math.tanh %34 : vector<8x128xf32>
    %c0_21 = arith.constant 0 : index
    %c0_22 = arith.constant 0 : index
    %36 = vector.load %arg10[%c0_21, %c0_22] : memref<1x128xf32, #tpu.memory_space<vmem>>, vector<1x128xf32>
    %37 = vector.broadcast %2 : vector<8x1xf32> to vector<8x128xf32>
    %38 = vector.broadcast %36 : vector<1x128xf32> to vector<8x128xf32>
    %39 = arith.mulf %37, %38 : vector<8x128xf32>
    %40 = math.tanh %39 : vector<8x128xf32>
    %41 = arith.subf %35, %0 : vector<8x128xf32>
    %42 = arith.mulf %23, %41 : vector<8x128xf32>
    %43 = arith.mulf %40, %42 : vector<8x128xf32>
    %44 = arith.addf %0, %43 : vector<8x128xf32>
    %c0_23 = arith.constant 0 : index
    %c0_24 = arith.constant 0 : index
    %45 = vector.load %arg11[%c0_23, %c0_24] : memref<8x128xf32, #tpu.memory_space<vmem>>, vector<8x128xf32>
    tpu.vector_store %arg11[%c0_23, %c0_24], %44 {strides = array<i32>} : memref<8x128xf32, #tpu.memory_space<vmem>>, vector<8x128xf32>,
    return
  }
  func.func @transform_0(%arg0: i32) -> (i32, i32) {
    %c0_i32 = arith.constant 0 : i32
    %c0_i32_0 = arith.constant 0 : i32
    return %arg0, %c0_i32 : i32, i32
  }
  func.func @transform_1(%arg0: i32) -> (i32, i32) {
    %c0_i32 = arith.constant 0 : i32
    %c0_i32_0 = arith.constant 0 : i32
    return %arg0, %c0_i32 : i32, i32
  }
  func.func @transform_2(%arg0: i32) -> (i32, i32) {
    %c0_i32 = arith.constant 0 : i32
    %c0_i32_0 = arith.constant 0 : i32
    return %arg0, %c0_i32 : i32, i32
  }
  func.func @transform_3(%arg0: i32) -> (i32, i32) {
    %c0_i32 = arith.constant 0 : i32
    %c0_i32_0 = arith.constant 0 : i32
    %c0_i32_1 = arith.constant 0 : i32
    return %c0_i32, %c0_i32_0 : i32, i32
  }
  func.func @transform_4(%arg0: i32) -> (i32, i32) {
    %c0_i32 = arith.constant 0 : i32
    %c0_i32_0 = arith.constant 0 : i32
    %c0_i32_1 = arith.constant 0 : i32
    return %c0_i32, %c0_i32_0 : i32, i32
  }
  func.func @transform_5(%arg0: i32) -> (i32, i32) {
    %c0_i32 = arith.constant 0 : i32
    %c0_i32_0 = arith.constant 0 : i32
    %c0_i32_1 = arith.constant 0 : i32
    return %c0_i32, %c0_i32_0 : i32, i32
  }
  func.func @transform_6(%arg0: i32) -> (i32, i32) {
    %c0_i32 = arith.constant 0 : i32
    %c0_i32_0 = arith.constant 0 : i32
    %c0_i32_1 = arith.constant 0 : i32
    return %c0_i32, %c0_i32_0 : i32, i32
  }
  func.func @transform_7(%arg0: i32) -> (i32, i32) {
    %c0_i32 = arith.constant 0 : i32
    %c0_i32_0 = arith.constant 0 : i32
    %c0_i32_1 = arith.constant 0 : i32
    return %c0_i32, %c0_i32_0 : i32, i32
  }
  func.func @transform_8(%arg0: i32) -> (i32, i32) {
    %c0_i32 = arith.constant 0 : i32
    %c0_i32_0 = arith.constant 0 : i32
    %c0_i32_1 = arith.constant 0 : i32
    return %c0_i32, %c0_i32_0 : i32, i32
  }
  func.func @transform_9(%arg0: i32) -> (i32, i32) {
    %c0_i32 = arith.constant 0 : i32
    %c0_i32_0 = arith.constant 0 : i32
    %c0_i32_1 = arith.constant 0 : i32
    return %c0_i32, %c0_i32_0 : i32, i32
  }
  func.func @transform_10(%arg0: i32) -> (i32, i32) {
    %c0_i32 = arith.constant 0 : i32
    %c0_i32_0 = arith.constant 0 : i32
    return %arg0, %c0_i32 : i32, i32
  }
}

</mosaic_0001>

<llo_original>
// kernel: tpu_custom_call.1
$region0: #{tpu_custom_call.1}
  #allocation0 [shape = 'u32[]', space=smem, size = 0x4, offset = 0x4, fixed_abs, tag = 'smem constant byte address 0x4 - core index']
  #allocation1 [shape = 'u32[144,128]{1,0:T(1,128)}', space=vmem, size = 0x12000, scoped, tag = 'internal scratch']
  %s0 = inlined_call_operand.vmem [shape: f32[16,128], index: 0, kind: input, shape index: {}]
  %s1 = inlined_call_operand.hbm [shape: f32[16,128], index: 1, kind: input, shape index: {}]
  %s2 = inlined_call_operand.vmem [shape: f32[16,1], index: 2, kind: input, shape index: {}]
  %s3 = inlined_call_operand.hbm [shape: f32[128,256], index: 3, kind: input, shape index: {}]
  %s4 = inlined_call_operand.vmem [shape: f32[1,256], index: 4, kind: input, shape index: {}]
  %s5 = inlined_call_operand.vmem [shape: f32[1,256], index: 5, kind: input, shape index: {}]
  %s6 = inlined_call_operand.hbm [shape: f32[128,128], index: 6, kind: input, shape index: {}]
  %s7 = inlined_call_operand.vmem [shape: f32[1,128], index: 7, kind: input, shape index: {}]
  %s8 = inlined_call_operand.vmem [shape: f32[1,128], index: 8, kind: input, shape index: {}]
  %s9 = inlined_call_operand.vmem [shape: f32[1,128], index: 9, kind: input, shape index: {}]
  %s10 = inlined_call_operand.hbm [shape: f32[16,128], index: 10, kind: output, shape index: {}]
  %s11 = sld [smem:[#allocation0]]
  $region85: #{tpu_custom_call.1} parent=0
    _
  %s13 = ssub.s32 1, %s11
  %s14 = scalar_select 0, %s13, %s11
  $region1: #{tpu_custom_call.1} parent=0
    #allocation2 [shape = 'u8[8192]{0}', space=vmem, size = 0x2000, scoped, tag = 'input window, operand 1']
    #allocation3 [shape = 's32[2]{0}', space=sflag, size = 0x8, scoped, tag = 'scoped memory for tpu_custom_call.1']
    #allocation4 [shape = 's32[2]{0}', space=sflag, size = 0x8, scoped, tag = 'scoped memory for tpu_custom_call.1']
    #allocation5 [shape = 'u8[131072]{0}', space=vmem, size = 0x20000, scoped, tag = 'input window, operand 3, single buffered']
    #allocation6 [shape = 's32[1]{0}', space=sflag, size = 0x4, scoped, tag = 'scoped memory for tpu_custom_call.1']
    #allocation7 [shape = 'u8[65536]{0}', space=vmem, size = 0x10000, scoped, tag = 'input window, operand 6, single buffered']
    #allocation8 [shape = 'u8[8192]{0}', space=vmem, size = 0x2000, scoped, tag = 'output window, operand 0']
    %15 = vsyncpa [#allocation3], 0
    %s16 = scalar_lea.sflag [#allocation3], 1
    %17 = vsyncpa %s16, 0
    %18 = vsyncpa [#allocation6], 0
    %19 = vsyncpa [#allocation4], 0
    %s20 = scalar_lea.sflag [#allocation4], 1
    %21 = vsyncpa %s20, 0
    loop: start=0, step=1, limit=4
    $region2: #{tpu_custom_call.1} parent=1 // loop_pre_header
      _
    $region3: #{tpu_custom_call.1} parent=1 // loop_header
      %s23 = sphi 0, %s27
      %p24 = scmp.ge.s32.totalorder %s23, 4
      %s33 = sphi 0, %s35
      %s36 = sphi 0, %s33
      %s37 = sphi 0, %s36
      %s53 = sphi 0, %s37
      %s59 = sphi 0, %s61
      %s62 = sphi 0, %s59
      %s63 = sphi 0, %s62
      %s79 = sphi 0, %s63
      %s85 = sphi 0, %s87
      %s88 = sphi 0, %s85
      %s89 = sphi 0, %s88
      %s105 = sphi 0, %s89
      %s109 = sphi 0, %s109
      %s111 = sphi 0, %s109
      %s112 = sphi 0, %s111
      %s126 = sphi 0, %s112
      %s130 = sphi 0, %s130
      %s132 = sphi 0, %s130
      %s133 = sphi 0, %s132
      %s147 = sphi 0, %s133
      %s151 = sphi 0, %s151
      %s153 = sphi 0, %s151
      %s154 = sphi 0, %s153
      %s168 = sphi 0, %s154
      %s172 = sphi 0, %s172
      %s174 = sphi 0, %s172
      %s175 = sphi 0, %s174
      %s189 = sphi 0, %s175
      %s193 = sphi 0, %s193
      %s195 = sphi 0, %s193
      %s196 = sphi 0, %s195
      %s210 = sphi 0, %s196
      %s214 = sphi 0, %s214
      %s216 = sphi 0, %s214
      %s217 = sphi 0, %s216
      %s231 = sphi 0, %s217
      %s235 = sphi 0, %s235
      %s237 = sphi 0, %s235
      %s238 = sphi 0, %s237
      %s252 = sphi 0, %s238
      %s258 = sphi 0, %s260
      %s261 = sphi 0, %s258
      %s262 = sphi 0, %s261
      %s278 = sphi 0, %s262
    $region4: #{tpu_custom_call.1} parent=1 // loop_header_branch
      %26 = sbr.rel (%p24) target = $region8
    $region5: #{tpu_custom_call.1} parent=1 // loop_body
      %s28 = ssub.s32 %s23, 1
      %s29 = ssub.s32 %s23, 2
      %s30 = sadd.s32 %s23, 1
      %s31 = ssub.s32 %s23, %s30
      %p32 = scmp.eq.s32.totalorder %s31, 0
      %s34 = sadd.s32 %s33, 1
      %s35 = scalar_select %p32, %s33, %s34
      %p38 = pneg %p32
      %p39 = scmp.eq.s32.totalorder %s23, 1
      %p40 = por %p38, %p39
      %p41 = scmp.ne.s32.totalorder %s33, %s36
      %p42 = scmp.eq.s32.totalorder %s23, 0
      %p43 = por %p41, %p42
      %p44 = scmp.ne.s32.totalorder %s33, %s36
      %p45 = scmp.eq.s32.totalorder %s28, 1
      %p46 = por %p44, %p45
      %p47 = scmp.ne.s32.totalorder %s36, %s37
      %p48 = scmp.eq.s32.totalorder %s28, 0
      %p49 = por %p47, %p48
      %p50 = scmp.ne.s32.totalorder %s36, %s37
      %p51 = scmp.eq.s32.totalorder %s29, 1
      %p52 = por %p50, %p51
      %p54 = scmp.ne.s32.totalorder %s37, %s53
      %p55 = scmp.eq.s32.totalorder %s29, 0
      %p56 = por %p54, %p55
      %s57 = ssub.s32 %s23, %s30
      %p58 = scmp.eq.s32.totalorder %s57, 0
      %s60 = sadd.s32 %s59, 1
      %s61 = scalar_select %p58, %s59, %s60
      %p64 = pneg %p58
      %p65 = scmp.eq.s32.totalorder %s23, 1
      %p66 = por %p64, %p65
      %p67 = scmp.ne.s32.totalorder %s59, %s62
      %p68 = scmp.eq.s32.totalorder %s23, 0
      %p69 = por %p67, %p68
      %p70 = scmp.ne.s32.totalorder %s59, %s62
      %p71 = scmp.eq.s32.totalorder %s28, 1
      %p72 = por %p70, %p71
      %p73 = scmp.ne.s32.totalorder %s62, %s63
      %p74 = scmp.eq.s32.totalorder %s28, 0
      %p75 = por %p73, %p74
      %p76 = scmp.ne.s32.totalorder %s62, %s63
      %p77 = scmp.eq.s32.totalorder %s29, 1
      %p78 = por %p76, %p77
      %p80 = scmp.ne.s32.totalorder %s63, %s79
      %p81 = scmp.eq.s32.totalorder %s29, 0
      %p82 = por %p80, %p81
      %s83 = ssub.s32 %s23, %s30
      %p84 = scmp.eq.s32.totalorder %s83, 0
      %s86 = sadd.s32 %s85, 1
      %s87 = scalar_select %p84, %s85, %s86
      %p90 = pneg %p84
      %p91 = scmp.eq.s32.totalorder %s23, 1
      %p92 = por %p90, %p91
      %p93 = scmp.ne.s32.totalorder %s85, %s88
      %p94 = scmp.eq.s32.totalorder %s23, 0
      %p95 = por %p93, %p94
      %p96 = scmp.ne.s32.totalorder %s85, %s88
      %p97 = scmp.eq.s32.totalorder %s28, 1
      %p98 = por %p96, %p97
      %p99 = scmp.ne.s32.totalorder %s88, %s89
      %p100 = scmp.eq.s32.totalorder %s28, 0
      %p101 = por %p99, %p100
      %p102 = scmp.ne.s32.totalorder %s88, %s89
      %p103 = scmp.eq.s32.totalorder %s29, 1
      %p104 = por %p102, %p103
      %p106 = scmp.ne.s32.totalorder %s89, %s105
      %p107 = scmp.eq.s32.totalorder %s29, 0
      %p108 = por %p106, %p107
      %s110 = sadd.s32 %s109, 1
      %p113 = scmp.eq.s32.totalorder %s23, 1
      %p114 = scmp.ne.s32.totalorder %s109, %s111
      %p115 = scmp.eq.s32.totalorder %s23, 0
      %p116 = por %p114, %p115
      %p117 = scmp.ne.s32.totalorder %s109, %s111
      %p118 = scmp.eq.s32.totalorder %s28, 1
      %p119 = por %p117, %p118
      %p120 = scmp.ne.s32.totalorder %s111, %s112
      %p121 = scmp.eq.s32.totalorder %s28, 0
      %p122 = por %p120, %p121
      %p123 = scmp.ne.s32.totalorder %s111, %s112
      %p124 = scmp.eq.s32.totalorder %s29, 1
      %p125 = por %p123, %p124
      %p127 = scmp.ne.s32.totalorder %s112, %s126
      %p128 = scmp.eq.s32.totalorder %s29, 0
      %p129 = por %p127, %p128
      %s131 = sadd.s32 %s130, 1
      %p134 = scmp.eq.s32.totalorder %s23, 1
      %p135 = scmp.ne.s32.totalorder %s130, %s132
      %p136 = scmp.eq.s32.totalorder %s23, 0
      %p137 = por %p135, %p136
      %p138 = scmp.ne.s32.totalorder %s130, %s132
      %p139 = scmp.eq.s32.totalorder %s28, 1
      %p140 = por %p138, %p139
      %p141 = scmp.ne.s32.totalorder %s132, %s133
      %p142 = scmp.eq.s32.totalorder %s28, 0
      %p143 = por %p141, %p142
      %p144 = scmp.ne.s32.totalorder %s132, %s133
      %p145 = scmp.eq.s32.totalorder %s29, 1
      %p146 = por %p144, %p145
      %p148 = scmp.ne.s32.totalorder %s133, %s147
      %p149 = scmp.eq.s32.totalorder %s29, 0
      %p150 = por %p148, %p149
      %s152 = sadd.s32 %s151, 1
      %p155 = scmp.eq.s32.totalorder %s23, 1
      %p156 = scmp.ne.s32.totalorder %s151, %s153
      %p157 = scmp.eq.s32.totalorder %s23, 0
      %p158 = por %p156, %p157
      %p159 = scmp.ne.s32.totalorder %s151, %s153
      %p160 = scmp.eq.s32.totalorder %s28, 1
      %p161 = por %p159, %p160
      %p162 = scmp.ne.s32.totalorder %s153, %s154
      %p163 = scmp.eq.s32.totalorder %s28, 0
      %p164 = por %p162, %p163
      %p165 = scmp.ne.s32.totalorder %s153, %s154
      %p166 = scmp.eq.s32.totalorder %s29, 1
      %p167 = por %p165, %p166
      %p169 = scmp.ne.s32.totalorder %s154, %s168
      %p170 = scmp.eq.s32.totalorder %s29, 0
      %p171 = por %p169, %p170
      %s173 = sadd.s32 %s172, 1
      %p176 = scmp.eq.s32.totalorder %s23, 1
      %p177 = scmp.ne.s32.totalorder %s172, %s174
      %p178 = scmp.eq.s32.totalorder %s23, 0
      %p179 = por %p177, %p178
      %p180 = scmp.ne.s32.totalorder %s172, %s174
      %p181 = scmp.eq.s32.totalorder %s28, 1
      %p182 = por %p180, %p181
      %p183 = scmp.ne.s32.totalorder %s174, %s175
      %p184 = scmp.eq.s32.totalorder %s28, 0
      %p185 = por %p183, %p184
      %p186 = scmp.ne.s32.totalorder %s174, %s175
      %p187 = scmp.eq.s32.totalorder %s29, 1
      %p188 = por %p186, %p187
      %p190 = scmp.ne.s32.totalorder %s175, %s189
      %p191 = scmp.eq.s32.totalorder %s29, 0
      %p192 = por %p190, %p191
      %s194 = sadd.s32 %s193, 1
      %p197 = scmp.eq.s32.totalorder %s23, 1
      %p198 = scmp.ne.s32.totalorder %s193, %s195
      %p199 = scmp.eq.s32.totalorder %s23, 0
      %p200 = por %p198, %p199
      %p201 = scmp.ne.s32.totalorder %s193, %s195
      %p202 = scmp.eq.s32.totalorder %s28, 1
      %p203 = por %p201, %p202
      %p204 = scmp.ne.s32.totalorder %s195, %s196
      %p205 = scmp.eq.s32.totalorder %s28, 0
      %p206 = por %p204, %p205
      %p207 = scmp.ne.s32.totalorder %s195, %s196
      %p208 = scmp.eq.s32.totalorder %s29, 1
      %p209 = por %p207, %p208
      %p211 = scmp.ne.s32.totalorder %s196, %s210
      %p212 = scmp.eq.s32.totalorder %s29, 0
      %p213 = por %p211, %p212
      %s215 = sadd.s32 %s214, 1
      %p218 = scmp.eq.s32.totalorder %s23, 1
      %p219 = scmp.ne.s32.totalorder %s214, %s216
      %p220 = scmp.eq.s32.totalorder %s23, 0
      %p221 = por %p219, %p220
      %p222 = scmp.ne.s32.totalorder %s214, %s216
      %p223 = scmp.eq.s32.totalorder %s28, 1
      %p224 = por %p222, %p223
      %p225 = scmp.ne.s32.totalorder %s216, %s217
      %p226 = scmp.eq.s32.totalorder %s28, 0
      %p227 = por %p225, %p226
      %p228 = scmp.ne.s32.totalorder %s216, %s217
      %p229 = scmp.eq.s32.totalorder %s29, 1
      %p230 = por %p228, %p229
      %p232 = scmp.ne.s32.totalorder %s217, %s231
      %p233 = scmp.eq.s32.totalorder %s29, 0
      %p234 = por %p232, %p233
      %s236 = sadd.s32 %s235, 1
      %p239 = scmp.eq.s32.totalorder %s23, 1
      %p240 = scmp.ne.s32.totalorder %s235, %s237
      %p241 = scmp.eq.s32.totalorder %s23, 0
      %p242 = por %p240, %p241
      %p243 = scmp.ne.s32.totalorder %s235, %s237
      %p244 = scmp.eq.s32.totalorder %s28, 1
      %p245 = por %p243, %p244
      %p246 = scmp.ne.s32.totalorder %s237, %s238
      %p247 = scmp.eq.s32.totalorder %s28, 0
      %p248 = por %p246, %p247
      %p249 = scmp.ne.s32.totalorder %s237, %s238
      %p250 = scmp.eq.s32.totalorder %s29, 1
      %p251 = por %p249, %p250
      %p253 = scmp.ne.s32.totalorder %s238, %s252
      %p254 = scmp.eq.s32.totalorder %s29, 0
      %p255 = por %p253, %p254
      %s256 = ssub.s32 %s23, %s30
      %p257 = scmp.eq.s32.totalorder %s256, 0
      %s259 = sadd.s32 %s258, 1
      %s260 = scalar_select %p257, %s258, %s259
      %p263 = pneg %p257
      %p264 = scmp.eq.s32.totalorder %s23, 1
      %p265 = por %p263, %p264
      %p266 = scmp.ne.s32.totalorder %s258, %s261
      %p267 = scmp.eq.s32.totalorder %s23, 0
      %p268 = por %p266, %p267
      %p269 = scmp.ne.s32.totalorder %s258, %s261
      %p270 = scmp.eq.s32.totalorder %s28, 1
      %p271 = por %p269, %p270
      %p272 = scmp.ne.s32.totalorder %s261, %s262
      %p273 = scmp.eq.s32.totalorder %s28, 0
      %p274 = por %p272, %p273
      %p275 = scmp.ne.s32.totalorder %s261, %s262
      %p276 = scmp.eq.s32.totalorder %s29, 1
      %p277 = por %p275, %p276
      %p279 = scmp.ne.s32.totalorder %s262, %s278
      %p280 = scmp.eq.s32.totalorder %s29, 0
      %p281 = por %p279, %p280
      %p282 = scmp.le.s32.totalorder 1, %s23
      %p283 = scmp.lt.s32.totalorder %s23, 3
      %p284 = pnand %p282, %p283
      %p285 = pneg %p284
      // Predicated region
      $region9: #{tpu_custom_call.1} parent=5 // pred_check
        _
      $region10: #{tpu_custom_call.1} parent=5 // pred_check_branch
        %287 = sbr.rel (%p284) target = $region12
      $region11: #{tpu_custom_call.1} parent=5 // pred_region
        %s288 = ssub.s32 %s23, 1
        // Predicated region
        $region13: #{tpu_custom_call.1} parent=11 // pred_check
          %p289 = pneg %p122
        $region14: #{tpu_custom_call.1} parent=11 // pred_check_branch
          %291 = sbr.rel (%p289) target = $region16
        $region15: #{tpu_custom_call.1} parent=11 // pred_region
          %s293 = ssub.s32 4096, 4096
          %294 = vsyncadd [#allocation6], %s293
          %s295 = sshll.u32 [#allocation5], 4
          %s296 = int_to_ptr.vmem [resolvable:$true] %s295
          %301 = dma.hbm_to_vmem [thread:$0]  %s3, 4096, %s296, [#allocation6], 256, 256, 16
        $region16: #{tpu_custom_call.1} parent=11 // pred_fallthru
          _
        // Predicated region
        $region17: #{tpu_custom_call.1} parent=11 // pred_check
          %p302 = pneg %p143
        $region18: #{tpu_custom_call.1} parent=11 // pred_check_branch
          %304 = sbr.rel (%p302) target = $region20
        $region19: #{tpu_custom_call.1} parent=11 // pred_region
          _
        $region20: #{tpu_custom_call.1} parent=11 // pred_fallthru
          _
        // Predicated region
        $region21: #{tpu_custom_call.1} parent=11 // pred_check
          %p305 = pneg %p164
        $region22: #{tpu_custom_call.1} parent=11 // pred_check_branch
          %307 = sbr.rel (%p305) target = $region24
        $region23: #{tpu_custom_call.1} parent=11 // pred_region
          _
        $region24: #{tpu_custom_call.1} parent=11 // pred_fallthru
          _
        // Predicated region
        $region25: #{tpu_custom_call.1} parent=11 // pred_check
          %p308 = pneg %p185
        $region26: #{tpu_custom_call.1} parent=11 // pred_check_branch
          %310 = sbr.rel (%p308) target = $region28
        $region27: #{tpu_custom_call.1} parent=11 // pred_region
          %s312 = ssub.s32 2048, 2048
          %313 = vsyncadd [#allocation6], %s312
          %s314 = sshll.u32 [#allocation7], 4
          %s315 = int_to_ptr.vmem [resolvable:$true] %s314
          %320 = dma.hbm_to_vmem [thread:$0]  %s6, 2048, %s315, [#allocation6], 128, 128, 8
        $region28: #{tpu_custom_call.1} parent=11 // pred_fallthru
          _
        // Predicated region
        $region29: #{tpu_custom_call.1} parent=11 // pred_check
          %p321 = pneg %p206
        $region30: #{tpu_custom_call.1} parent=11 // pred_check_branch
          %323 = sbr.rel (%p321) target = $region32
        $region31: #{tpu_custom_call.1} parent=11 // pred_region
          _
        $region32: #{tpu_custom_call.1} parent=11 // pred_fallthru
          _
        // Predicated region
        $region33: #{tpu_custom_call.1} parent=11 // pred_check
          %p324 = pneg %p227
        $region34: #{tpu_custom_call.1} parent=11 // pred_check_branch
          %326 = sbr.rel (%p324) target = $region36
        $region35: #{tpu_custom_call.1} parent=11 // pred_region
          _
        $region36: #{tpu_custom_call.1} parent=11 // pred_fallthru
          _
        // Predicated region
        $region37: #{tpu_custom_call.1} parent=11 // pred_check
          %p327 = pneg %p248
        $region38: #{tpu_custom_call.1} parent=11 // pred_check_branch
          %329 = sbr.rel (%p327) target = $region40
        $region39: #{tpu_custom_call.1} parent=11 // pred_region
          _
        $region40: #{tpu_custom_call.1} parent=11 // pred_fallthru
          _
      $region12: #{tpu_custom_call.1} parent=5 // pred_fallthru
        _
      %p330 = scmp.lt.s32.totalorder %s23, 2
      // Predicated region
      $region41: #{tpu_custom_call.1} parent=5 // pred_check
        %p331 = pneg %p330
      $region42: #{tpu_custom_call.1} parent=5 // pred_check_branch
        %333 = sbr.rel (%p331) target = $region44
      $region43: #{tpu_custom_call.1} parent=5 // pred_region
        // Predicated region
        $region45: #{tpu_custom_call.1} parent=43 // pred_check
          %p334 = pneg %p43
        $region46: #{tpu_custom_call.1} parent=43 // pred_check_branch
          %336 = sbr.rel (%p334) target = $region48
        $region47: #{tpu_custom_call.1} parent=43 // pred_region
          %p337 = scmp.lt.s32.totalorder %s23, 1
          %s338 = scalar_select %p337, %s23, 1
          %s339 = smul.addr %s338, 8
          %s340 = scalar_lea.vmem %s0, %s339
        $region48: #{tpu_custom_call.1} parent=43 // pred_fallthru
          _
        // Predicated region
        $region49: #{tpu_custom_call.1} parent=43 // pred_check
          %p341 = pneg %p69
        $region50: #{tpu_custom_call.1} parent=43 // pred_check_branch
          %343 = sbr.rel (%p341) target = $region52
        $region51: #{tpu_custom_call.1} parent=43 // pred_region
          %s344 = sand.u32 %s59, 1
          %s345 = scalar_lea.sflag [#allocation3], %s344
          %s346 = sand.u32 %s59, 1
          %s347 = smul.addr %s346, 8
          %s348 = scalar_lea.vmem [#allocation2], %s347
          %s350 = ssub.s32 128, 128
          %351 = vsyncadd %s345, %s350
          %s352 = smul.addr %s23, 128
          %s353 = scalar_lea.hbm %s1, %s352
          %s355 = sshll.u32 %s348, 4
          %s356 = int_to_ptr.vmem [resolvable:$true] %s355
          %358 = dma.hbm_to_vmem [thread:$0]  %s353, 128, %s356, %s345
        $region52: #{tpu_custom_call.1} parent=43 // pred_fallthru
          _
        // Predicated region
        $region53: #{tpu_custom_call.1} parent=43 // pred_check
          %p359 = pneg %p95
        $region54: #{tpu_custom_call.1} parent=43 // pred_check_branch
          %361 = sbr.rel (%p359) target = $region56
        $region55: #{tpu_custom_call.1} parent=43 // pred_region
          %p362 = scmp.lt.s32.totalorder %s23, 1
          %s363 = scalar_select %p362, %s23, 1
          %s364 = smul.addr %s363, 8
          %s365 = scalar_lea.vmem %s2, %s364
        $region56: #{tpu_custom_call.1} parent=43 // pred_fallthru
          _
      $region44: #{tpu_custom_call.1} parent=5 // pred_fallthru
        _
      %p366 = scmp.le.s32.totalorder 1, %s23
      %p367 = scmp.lt.s32.totalorder %s23, 3
      %p368 = pnand %p366, %p367
      %p369 = pneg %p368
      // Predicated region
      $region57: #{tpu_custom_call.1} parent=5 // pred_check
        _
      $region58: #{tpu_custom_call.1} parent=5 // pred_check_branch
        %371 = sbr.rel (%p368) target = $region60
      $region59: #{tpu_custom_call.1} parent=5 // pred_region
        %s372 = ssub.s32 %s23, 1
        %s373 = sand.u32 %s62, 1
        %s374 = scalar_lea.sflag [#allocation3], %s373
        %s375 = sand.u32 %s62, 1
        %s376 = smul.addr %s375, 8
        %s377 = scalar_lea.vmem [#allocation2], %s376
        // Predicated region
        $region61: #{tpu_custom_call.1} parent=59 // pred_check
          %p378 = pneg %p75
        $region62: #{tpu_custom_call.1} parent=59 // pred_check_branch
          %380 = sbr.rel (%p378) target = $region64
        $region63: #{tpu_custom_call.1} parent=59 // pred_region
          %381 = dma.done %s374, 128
        $region64: #{tpu_custom_call.1} parent=59 // pred_fallthru
          _
        // Predicated region
        $region65: #{tpu_custom_call.1} parent=59 // pred_check
          %p382 = pneg %p122
        $region66: #{tpu_custom_call.1} parent=59 // pred_check_branch
          %384 = sbr.rel (%p382) target = $region68
        $region67: #{tpu_custom_call.1} parent=59 // pred_region
          %385 = dma.done [#allocation6], 4096
        $region68: #{tpu_custom_call.1} parent=59 // pred_fallthru
          _
        // Predicated region
        $region69: #{tpu_custom_call.1} parent=59 // pred_check
          %p386 = pneg %p185
        $region70: #{tpu_custom_call.1} parent=59 // pred_check_branch
          %388 = sbr.rel (%p386) target = $region72
        $region71: #{tpu_custom_call.1} parent=59 // pred_region
          %389 = dma.done [#allocation6], 2048
        $region72: #{tpu_custom_call.1} parent=59 // pred_fallthru
          _
        %p390 = scmp.lt.s32.totalorder %s28, 1
        %s391 = scalar_select %p390, %s28, 1
        %s392 = smul.addr %s391, 8
        %s393 = scalar_lea.vmem %s0, %s392
        %p394 = pneg %p49
        %p395 = pneg %p46
        %s396 = sand.u32 %s62, 1
        %s397 = scalar_lea.sflag [#allocation3], %s396
        %s398 = sand.u32 %s62, 1
        %s399 = smul.addr %s398, 8
        %s400 = scalar_lea.vmem [#allocation2], %s399
        %p401 = pneg %p75
        %p402 = pneg %p72
        %p403 = scmp.lt.s32.totalorder %s28, 1
        %s404 = scalar_select %p403, %s28, 1
        %s405 = smul.addr %s404, 8
        %s406 = scalar_lea.vmem %s2, %s405
        %p407 = pneg %p101
        %p408 = pneg %p98
        %p409 = pneg %p122
        %p410 = pneg %p119
        %p411 = pneg %p143
        %p412 = pneg %p140
        %p413 = pneg %p164
        %p414 = pneg %p161
        %p415 = pneg %p185
        %p416 = pneg %p182
        %p417 = pneg %p206
        %p418 = pneg %p203
        %p419 = pneg %p227
        %p420 = pneg %p224
        %p421 = pneg %p248
        %p422 = pneg %p245
        %p423 = pneg %p274
        %p424 = pneg %p271
        %s425 = sand.u32 %s261, 1
        %s426 = scalar_lea.sflag [#allocation4], %s425
        %s427 = sand.u32 %s261, 1
        %s428 = smul.addr %s427, 8
        %s429 = scalar_lea.vmem [#allocation8], %s428
        %p430 = scmp.lt.s32.totalorder %s28, 1
        %s431 = scalar_select %p430, %s28, 1
        %s432 = smul.addr %s431, 8
        %s433 = scalar_lea.vmem %s0, %s432
        %p434 = scmp.lt.s32.totalorder %s28, 1
        %s435 = scalar_select %p434, %s28, 1
        %s436 = smul.addr %s435, 8
        %s437 = scalar_lea.vmem %s2, %s436
        %v438 = vld [vmem:[%s433] sm:$0xff]
        %v439 = vld [vmem:[%s377] sm:$0xff]
        %v440 = vld [vmem:[%s437] sm:$0xff]
        %v441 = vld [vmem:[#allocation5] sm:$0xff]
        %v442 = vld [vmem:[#allocation5 + $0x8] sm:$0xff]
        %v443 = vld [vmem:[#allocation5 + $0x10] sm:$0xff]
        %v444 = vld [vmem:[#allocation5 + $0x18] sm:$0xff]
        %v445 = vld [vmem:[#allocation5 + $0x20] sm:$0xff]
        %v446 = vld [vmem:[#allocation5 + $0x28] sm:$0xff]
        %v447 = vld [vmem:[#allocation5 + $0x30] sm:$0xff]
        %v448 = vld [vmem:[#allocation5 + $0x38] sm:$0xff]
        %v449 = vld [vmem:[#allocation5 + $0x40] sm:$0xff]
        %v450 = vld [vmem:[#allocation5 + $0x48] sm:$0xff]
        %v451 = vld [vmem:[#allocation5 + $0x50] sm:$0xff]
        %v452 = vld [vmem:[#allocation5 + $0x58] sm:$0xff]
        %v453 = vld [vmem:[#allocation5 + $0x60] sm:$0xff]
        %v454 = vld [vmem:[#allocation5 + $0x68] sm:$0xff]
        %v455 = vld [vmem:[#allocation5 + $0x70] sm:$0xff]
        %v456 = vld [vmem:[#allocation5 + $0x78] sm:$0xff]
        %v457 = vld [vmem:[#allocation5 + $0x80] sm:$0xff]
        %v458 = vld [vmem:[#allocation5 + $0x88] sm:$0xff]
        %v459 = vld [vmem:[#allocation5 + $0x90] sm:$0xff]
        %v460 = vld [vmem:[#allocation5 + $0x98] sm:$0xff]
        %v461 = vld [vmem:[#allocation5 + $0xa0] sm:$0xff]
        %v462 = vld [vmem:[#allocation5 + $0xa8] sm:$0xff]
        %v463 = vld [vmem:[#allocation5 + $0xb0] sm:$0xff]
        %v464 = vld [vmem:[#allocation5 + $0xb8] sm:$0xff]
        %v465 = vld [vmem:[#allocation5 + $0xc0] sm:$0xff]
        %v466 = vld [vmem:[#allocation5 + $0xc8] sm:$0xff]
        %v467 = vld [vmem:[#allocation5 + $0xd0] sm:$0xff]
        %v468 = vld [vmem:[#allocation5 + $0xd8] sm:$0xff]
        %v469 = vld [vmem:[#allocation5 + $0xe0] sm:$0xff]
        %v470 = vld [vmem:[#allocation5 + $0xe8] sm:$0xff]
        %v471 = vld [vmem:[#allocation5 + $0xf0] sm:$0xff]
        %v472 = vld [vmem:[#allocation5 + $0xf8] sm:$0xff]
        %v473 = vld [vmem:[%s4] sm:$0x3]
        %475 = vset.pattern.permute.xlu0 0
        %476 = vperm.xlu0 %475, %v440
        %v477 = vpop.permute.xlu0 %476
        %v480 = vlaneseq
        %v481 = vshrl.u32 %v480, 7
        %v482 = vsub.s32 0, %v481
        %v483 = vrot.slane %v473, %v482
        %v484 = vlaneseq
        %v485 = vshrl.u32 %v484, 7
        %v486 = vsub.s32 1, %v485
        %v487 = vrot.slane %v473, %v486
        %v490 = vmul.f32 %v477, %v483
        %v491 = vmul.f32 %v477, %v487
        %492 = vmatprep.subr.mxu0 %v442
        %493 = vmatpush1.msra.mxu0 %v441
        %494 = vmatprep.subr.mxu0 %v444
        %495 = vmatpush1.msra.mxu0 %v443
        %496 = vmatprep.subr.mxu0 %v446
        %497 = vmatpush1.msra.mxu0 %v445
        %498 = vmatprep.subr.mxu0 %v448
        %499 = vmatpush1.msra.mxu0 %v447
        %500 = vmatprep.subr.mxu0 %v450
        %501 = vmatpush1.msra.mxu0 %v449
        %502 = vmatprep.subr.mxu0 %v452
        %503 = vmatpush1.msra.mxu0 %v451
        %504 = vmatprep.subr.mxu0 %v454
        %505 = vmatpush1.msra.mxu0 %v453
        %506 = vmatprep.subr.mxu0 %v456
        %507 = vmatpush1.msra.mxu0 %v455
        %508 = vmatprep.subr.mxu0 %v458
        %509 = vmatpush1.msra.mxu0 %v457
        %510 = vmatprep.subr.mxu0 %v460
        %511 = vmatpush1.msra.mxu0 %v459
        %512 = vmatprep.subr.mxu0 %v462
        %513 = vmatpush1.msra.mxu0 %v461
        %514 = vmatprep.subr.mxu0 %v464
        %515 = vmatpush1.msra.mxu0 %v463
        %516 = vmatprep.subr.mxu0 %v466
        %517 = vmatpush1.msra.mxu0 %v465
        %518 = vmatprep.subr.mxu0 %v468
        %519 = vmatpush1.msra.mxu0 %v467
        %520 = vmatprep.subr.mxu0 %v470
        %521 = vmatpush1.msra.mxu0 %v469
        %522 = vmatprep.subr.mxu0 %v472
        %523 = vmatpush1.msra.mxu0 %v471
        %524 = vmatprep.subr.mxu0 0.0
        %525 = vmatpush1.msra.mxu0 0.0
        %526 = vmatprep.subr.mxu0 0.0
        %527 = vmatpush1.msra.mxu0 0.0
        %528 = vmatprep.subr.mxu0 0.0
        %529 = vmatpush1.msra.mxu0 0.0
        %530 = vmatprep.subr.mxu0 0.0
        %531 = vmatpush1.msra.mxu0 0.0
        %532 = vmatprep.subr.mxu0 0.0
        %533 = vmatpush1.msra.mxu0 0.0
        %534 = vmatprep.subr.mxu0 0.0
        %535 = vmatpush1.msra.mxu0 0.0
        %536 = vmatprep.subr.mxu0 0.0
        %537 = vmatpush1.msra.mxu0 0.0
        %538 = vmatprep.subr.mxu0 0.0
        %539 = vmatpush1.msra.mxu0 0.0
        %540 = vmatprep.subr.mxu0 0.0
        %541 = vmatpush1.msra.mxu0 0.0
        %542 = vmatprep.subr.mxu0 0.0
        %543 = vmatpush1.msra.mxu0 0.0
        %544 = vmatprep.subr.mxu0 0.0
        %545 = vmatpush1.msra.mxu0 0.0
        %546 = vmatprep.subr.mxu0 0.0
        %547 = vmatpush1.msra.mxu0 0.0
        %548 = vmatprep.subr.mxu0 0.0
        %549 = vmatpush1.msra.mxu0 0.0
        %550 = vmatprep.subr.mxu0 0.0
        %551 = vmatpush1.msra.mxu0 0.0
        %552 = vmatprep.subr.mxu0 0.0
        %553 = vmatpush1.msra.mxu0 0.0
        %554 = vmatprep.subr.mxu0 0.0
        %555 = vmatpush1.msra.mxu0 0.0
        %556 = vmatprep.mubr.f32.mxu0 0.0
        %557 = vmatmul.mubr.f32.gmra.mrb[0].mxu0 %v439
        %v558 = vpop.f32.mrb[0].mxu0
        %v559 = vadd.f32 %v490, %v558
        %v560 = vpop.f32.mrb[0].mxu0
        %v561 = vadd.f32 %v491, %v560
        %562 = vdwg.mxu0
        %v563 = vld [vmem:[%s5] sm:$0x3]
        %v565 = vlaneseq
        %v566 = vshrl.u32 %v565, 7
        %v567 = vsub.s32 0, %v566
        %v568 = vrot.slane %v563, %v567
        %v569 = vlaneseq
        %v570 = vshrl.u32 %v569, 7
        %v571 = vsub.s32 1, %v570
        %v572 = vrot.slane %v563, %v571
        %v575 = vadd.f32 %v559, %v568
        %v576 = vadd.f32 %v561, %v572
        %v577 = vxor.u32 %v575, 2147483648
        %v578 = vxor.u32 %v576, 2147483648
        %v579 = vmul.f32 %v577, 1.442695
        %v580 = vpow.pop %v579
        %v581 = vmul.f32 %v578, 1.442695
        %v582 = vpow.pop %v581
        %v583 = vadd.f32 %v580, 1.0
        %v584 = vadd.f32 %v582, 1.0
        %v585 = vrcp.pop %v583
        %v586 = vmul.f32 1.0, %v585
        %v587 = vrcp.pop %v584
        %v588 = vmul.f32 1.0, %v587
        %v589 = vmul.f32 %v586, 0.8
        %v590 = vmul.f32 %v588, 0.4
        %v591 = vmul.f32 %v589, %v439
        %v592 = vld [vmem:[#allocation7] sm:$0xff]
        %v593 = vld [vmem:[#allocation7 + $0x8] sm:$0xff]
        %v594 = vld [vmem:[#allocation7 + $0x10] sm:$0xff]
        %v595 = vld [vmem:[#allocation7 + $0x18] sm:$0xff]
        %v596 = vld [vmem:[#allocation7 + $0x20] sm:$0xff]
        %v597 = vld [vmem:[#allocation7 + $0x28] sm:$0xff]
        %v598 = vld [vmem:[#allocation7 + $0x30] sm:$0xff]
        %v599 = vld [vmem:[#allocation7 + $0x38] sm:$0xff]
        %v600 = vld [vmem:[#allocation7 + $0x40] sm:$0xff]
        %v601 = vld [vmem:[#allocation7 + $0x48] sm:$0xff]
        %v602 = vld [vmem:[#allocation7 + $0x50] sm:$0xff]
        %v603 = vld [vmem:[#allocation7 + $0x58] sm:$0xff]
        %v604 = vld [vmem:[#allocation7 + $0x60] sm:$0xff]
        %v605 = vld [vmem:[#allocation7 + $0x68] sm:$0xff]
        %v606 = vld [vmem:[#allocation7 + $0x70] sm:$0xff]
        %v607 = vld [vmem:[#allocation7 + $0x78] sm:$0xff]
        %v608 = vld [vmem:[%s7] sm:$0x1]
        %v610 = vlaneseq
        %v611 = vshrl.u32 %v610, 7
        %v612 = vsub.s32 0, %v611
        %v613 = vrot.slane %v608, %v612
        %v615 = vmul.f32 %v477, %v613
        %616 = vmatprep.subr.mxu0 0.0
        %617 = vmatpush1.msra.mxu0 %v592
        %618 = vmatprep.subr.mxu0 0.0
        %619 = vmatpush1.msra.mxu0 %v593
        %620 = vmatprep.subr.mxu0 0.0
        %621 = vmatpush1.msra.mxu0 %v594
        %622 = vmatprep.subr.mxu0 0.0
        %623 = vmatpush1.msra.mxu0 %v595
        %624 = vmatprep.subr.mxu0 0.0
        %625 = vmatpush1.msra.mxu0 %v596
        %626 = vmatprep.subr.mxu0 0.0
        %627 = vmatpush1.msra.mxu0 %v597
        %628 = vmatprep.subr.mxu0 0.0
        %629 = vmatpush1.msra.mxu0 %v598
        %630 = vmatprep.subr.mxu0 0.0
        %631 = vmatpush1.msra.mxu0 %v599
        %632 = vmatprep.subr.mxu0 0.0
        %633 = vmatpush1.msra.mxu0 %v600
        %634 = vmatprep.subr.mxu0 0.0
        %635 = vmatpush1.msra.mxu0 %v601
        %636 = vmatprep.subr.mxu0 0.0
        %637 = vmatpush1.msra.mxu0 %v602
        %638 = vmatprep.subr.mxu0 0.0
        %639 = vmatpush1.msra.mxu0 %v603
        %640 = vmatprep.subr.mxu0 0.0
        %641 = vmatpush1.msra.mxu0 %v604
        %642 = vmatprep.subr.mxu0 0.0
        %643 = vmatpush1.msra.mxu0 %v605
        %644 = vmatprep.subr.mxu0 0.0
        %645 = vmatpush1.msra.mxu0 %v606
        %646 = vmatprep.subr.mxu0 0.0
        %647 = vmatpush1.msra.mxu0 %v607
        %648 = vmatprep.subr.mxu0 0.0
        %649 = vmatpush1.msra.mxu0 0.0
        %650 = vmatprep.subr.mxu0 0.0
        %651 = vmatpush1.msra.mxu0 0.0
        %652 = vmatprep.subr.mxu0 0.0
        %653 = vmatpush1.msra.mxu0 0.0
        %654 = vmatprep.subr.mxu0 0.0
        %655 = vmatpush1.msra.mxu0 0.0
        %656 = vmatprep.subr.mxu0 0.0
        %657 = vmatpush1.msra.mxu0 0.0
        %658 = vmatprep.subr.mxu0 0.0
        %659 = vmatpush1.msra.mxu0 0.0
        %660 = vmatprep.subr.mxu0 0.0
        %661 = vmatpush1.msra.mxu0 0.0
        %662 = vmatprep.subr.mxu0 0.0
        %663 = vmatpush1.msra.mxu0 0.0
        %664 = vmatprep.subr.mxu0 0.0
        %665 = vmatpush1.msra.mxu0 0.0
        %666 = vmatprep.subr.mxu0 0.0
        %667 = vmatpush1.msra.mxu0 0.0
        %668 = vmatprep.subr.mxu0 0.0
        %669 = vmatpush1.msra.mxu0 0.0
        %670 = vmatprep.subr.mxu0 0.0
        %671 = vmatpush1.msra.mxu0 0.0
        %672 = vmatprep.subr.mxu0 0.0
        %673 = vmatpush1.msra.mxu0 0.0
        %674 = vmatprep.subr.mxu0 0.0
        %675 = vmatpush1.msra.mxu0 0.0
        %676 = vmatprep.subr.mxu0 0.0
        %677 = vmatpush1.msra.mxu0 0.0
        %678 = vmatprep.subr.mxu0 0.0
        %679 = vmatpush1.msra.mxu0 0.0
        %680 = vmatprep.mubr.f32.mxu0 0.0
        %681 = vmatmul.mubr.f32.gmra.mrb[0].mxu0 %v591
        %v682 = vpop.f32.mrb[0].mxu0
        %v683 = vadd.f32 %v615, %v682
        %v684 = vpop.f32.mrb[0].mxu0
        %685 = vdwg.mxu0
        %v686 = vld [vmem:[%s8] sm:$0x1]
        %v688 = vlaneseq
        %v689 = vshrl.u32 %v688, 7
        %v690 = vsub.s32 0, %v689
        %v691 = vrot.slane %v686, %v690
        %v693 = vadd.f32 %v683, %v691
        %v694 = vtanh.pop %v693
        %v695 = vld [vmem:[%s9] sm:$0x1]
        %v697 = vlaneseq
        %v698 = vshrl.u32 %v697, 7
        %v699 = vsub.s32 0, %v698
        %v700 = vrot.slane %v695, %v699
        %v702 = vmul.f32 %v477, %v700
        %v703 = vtanh.pop %v702
        %v704 = vsub.f32 %v694, %v438
        %v705 = vmul.f32 %v590, %v704
        %v706 = vmul.f32 %v703, %v705
        %v707 = vadd.f32 %v438, %v706
        %708 = vst [vmem:[%s429] sm:$0xff] %v707
        %s709 = sand.u32 %s261, 1
        %s710 = scalar_lea.sflag [#allocation4], %s709
        %s711 = sand.u32 %s261, 1
        %s712 = smul.addr %s711, 8
        %s713 = scalar_lea.vmem [#allocation8], %s712
        // Predicated region
        $region73: #{tpu_custom_call.1} parent=59 // pred_check
          %p714 = pneg %p271
        $region74: #{tpu_custom_call.1} parent=59 // pred_check_branch
          %716 = sbr.rel (%p714) target = $region76
        $region75: #{tpu_custom_call.1} parent=59 // pred_region
          %s718 = ssub.s32 128, 128
          %719 = vsyncadd %s710, %s718
          %s720 = smul.addr %s28, 128
          %s721 = scalar_lea.hbm %s10, %s720
          %s723 = sshll.u32 %s713, 4
          %s724 = int_to_ptr.vmem [resolvable:$true] %s723
          %726 = dma.vmem_to_hbm [thread:$0]  %s724, 128, %s721, %s710
        $region76: #{tpu_custom_call.1} parent=59 // pred_fallthru
          _
      $region60: #{tpu_custom_call.1} parent=5 // pred_fallthru
        _
      %p727 = scmp.le.s32.totalorder 2, %s23
      // Predicated region
      $region77: #{tpu_custom_call.1} parent=5 // pred_check
        %p728 = pneg %p727
      $region78: #{tpu_custom_call.1} parent=5 // pred_check_branch
        %730 = sbr.rel (%p728) target = $region80
      $region79: #{tpu_custom_call.1} parent=5 // pred_region
        %s731 = ssub.s32 %s23, 2
        // Predicated region
        $region81: #{tpu_custom_call.1} parent=79 // pred_check
          %p732 = pneg %p277
        $region82: #{tpu_custom_call.1} parent=79 // pred_check_branch
          %734 = sbr.rel (%p732) target = $region84
        $region83: #{tpu_custom_call.1} parent=79 // pred_region
          %s735 = sand.u32 %s262, 1
          %s736 = scalar_lea.sflag [#allocation4], %s735
          %s737 = sand.u32 %s262, 1
          %s738 = smul.addr %s737, 8
          %s739 = scalar_lea.vmem [#allocation8], %s738
          %740 = dma.done %s736, 128
        $region84: #{tpu_custom_call.1} parent=79 // pred_fallthru
          _
      $region80: #{tpu_custom_call.1} parent=5 // pred_fallthru
        _
    $region6: #{tpu_custom_call.1} parent=1 // loop_footer
      %s27 = sadd.s32 1, %s23
    $region7: #{tpu_custom_call.1} parent=1 // loop_footer_branch
      %22 = sbr.rel target = $region3
    $region8: #{tpu_custom_call.1} parent=1 // loop_exit
      _
    %741 = vsyncpa [#allocation3], 1
    %s742 = scalar_lea.sflag [#allocation3], 1
    %743 = vsyncpa %s742, 1
    %744 = vsyncpa [#allocation6], 1
    %745 = vsyncpa [#allocation4], 1
    %s746 = scalar_lea.sflag [#allocation4], 1
    %747 = vsyncpa %s746, 1

</llo_original>
